<compile_context>
chip_gen: v7x
topology: tpu7x:2x2x1
jax: 0.10.0
libtpu: 0.0.40
codegen_flags: <defaults>
</compile_context>

<pallas_src>
import functools

import jax
import jax.numpy as jnp
from jax.experimental import pallas as pl
from jax.experimental.pallas import tpu as pltpu


def _conv_bn_crelu_kernel(x_ref, w_ref, bias_ref, out_ref):
    """One M-tile per grid step.

    x_ref:    (TM, K*Wp*Cin)         bf16  tap-stacked packed input rows
    w_ref:    (K*Wp*Cin, 2*Wo*Cout)  bf16  banded [W, -W], BN scale folded in
    bias_ref: (1, 2*Wo*Cout)         f32   [b, -b], tiled per output column
    out_ref:  (TM, 2*Wo*Cout)              [relu(y), relu(-y)]
    """
    y = jnp.dot(x_ref[...], w_ref[...], preferred_element_type=jnp.float32)
    y = y + bias_ref[...]                       # single f32 VPU add (bias)
    out_ref[...] = jnp.maximum(y, 0.0).astype(out_ref.dtype)   # one lane-dense store


def fold_conv_bn_crelu_params(weight, gamma, beta, running_mean, running_var,
                              *, H, W, stride, kernel_size=3, eps=1e-5):
    """One-time weight prep (hoisted out of the per-call path).

    Returns:
      w2:    (K*Wp*Cin, 2*Wo*Cout) bf16 banded weight, columns [W, -W]
      bias2: (1, 2*Wo*Cout)        f32  tiled bias, columns [b, -b]
    """
    Cout, Cin, K, _ = weight.shape
    assert K == kernel_size
    s = stride
    Hp, Wp = H + 2, W + 2                              # conv padding = 1
    Wo = (Wp - K) // s + 1

    # Fold BatchNorm (eval mode) into the conv weight / bias.
    scale = gamma / jnp.sqrt(running_var + eps)        # (Cout,)
    bias = beta - running_mean * scale                 # (Cout,)

    # (Cout, Cin, K, K) -> (K, K, Cin, Cout), BN scale folded per out channel.
    w_t = jnp.transpose(weight, (2, 3, 1, 0)).astype(jnp.float32) * scale
    w_flat = w_t.reshape(K, K * Cin, Cout)             # [kh, kw*Cin+ci, co]

    # Banded weight B[kh, (wo*s+kw)*Cin+ci, wo*Cout+co] = w[kh,kw,ci,co]*scale[co]
    rows = jnp.arange(Wo)[:, None] * s * Cin + jnp.arange(K * Cin)[None, :]
    cols = jnp.arange(Wo)[:, None] * Cout + jnp.arange(Cout)[None, :]
    vals = jnp.broadcast_to(w_flat[:, None, :, :], (K, Wo, K * Cin, Cout))
    w_band = jnp.zeros((K, Wp * Cin, Wo * Cout), jnp.float32).at[
        jnp.arange(K)[:, None, None, None],
        rows[None, :, :, None],
        cols[None, :, None, :]].set(vals)

    # Stack the K row-taps along the contraction axis and append negated
    # columns so a single relu produces the CReLU pair:
    #   relu(x @ [W, -W] + [b, -b]) = [relu(y), relu(-y)]
    w_stack = w_band.reshape(K * Wp * Cin, Wo * Cout)
    w2 = jnp.concatenate([w_stack, -w_stack], axis=1).astype(jnp.bfloat16)

    bias_tiled = jnp.tile(bias, Wo).reshape(1, Wo * Cout)
    bias2 = jnp.concatenate([bias_tiled, -bias_tiled], axis=1).astype(jnp.float32)
    return w2, bias2


@functools.partial(jax.jit, static_argnames=("stride", "kernel_size"))
def conv_bn_crelu(x_nchw, w2, bias2, *, stride, kernel_size=3):
    """Forward of _conv_bn_crelu.  x_nchw: (N, Cin, H, W) -> (N, 2*Cout, Ho, Wo)."""
    N, Cin, H, W = x_nchw.shape
    K, s = kernel_size, stride
    Hp, Wp = H + 2, W + 2
    Ho = (Hp - K) // s + 1
    Wo = (Wp - K) // s + 1
    Nl = bias2.shape[1] // 2                           # = Wo*Cout
    Cout = Nl // Wo
    Ktot = K * Wp * Cin

    # ---- activation packing (cheap, per call) -------------------------------
    # NCHW -> NHWC, zero-pad spatial by 1, pack (W, Cin) on the lane axis, then
    # stack the K row-taps along the contraction axis:
    #   lhs[(n, ho), kh*Wp*Cin + col] = x_pad[n, ho*s + kh, col]
    x_nhwc = jnp.transpose(x_nchw, (0, 2, 3, 1))
    x_pad = jnp.pad(x_nhwc, ((0, 0), (1, 1), (1, 1), (0, 0)))
    x_packed = x_pad.reshape(N, Hp, Wp * Cin)
    taps = [x_packed[:, kh:kh + s * Ho:s, :] for kh in range(K)]  # (N,Ho,Wp*Cin) each
    lhs = jnp.concatenate(taps, axis=-1).reshape(N * Ho, Ktot).astype(jnp.bfloat16)

    # ---- M tiling: fill the MXU M axis, but keep >=2 parallel grid steps so
    # both v7x TensorCores get work (near-zero impact on v5e/v6e).
    M = N * Ho
    tm = 8 if M <= 8 else max(8, min(256, (M // 2) // 8 * 8))
    grid_m = pl.cdiv(M, tm)
    M_pad = grid_m * tm
    if M_pad != M:
        lhs = jnp.pad(lhs, ((0, M_pad - M), (0, 0)))

    out = pl.pallas_call(
        _conv_bn_crelu_kernel,
        out_shape=jax.ShapeDtypeStruct((M_pad, 2 * Nl), x_nchw.dtype),
        grid_spec=pltpu.PrefetchScalarGridSpec(
            num_scalar_prefetch=0,
            grid=(grid_m,),
            in_specs=[
                pl.BlockSpec((tm, Ktot), lambda m: (m, 0)),
                # Constant block index -> weight / bias stay resident in VMEM.
                # (At larger W: mark pipeline_mode=pl.Buffered(1) + band-tile.)
                pl.BlockSpec((Ktot, 2 * Nl), lambda m: (0, 0)),
                pl.BlockSpec((1, 2 * Nl), lambda m: (0, 0)),
            ],
            out_specs=pl.BlockSpec((tm, 2 * Nl), lambda m: (m, 0)),
        ),
        compiler_params=pltpu.CompilerParams(
            dimension_semantics=("parallel",)),
    )(lhs, w2, bias2)

    # (M, 2*Wo*Cout) -> NHWC with CReLU channel concat -> NCHW (torch layout).
    out = out[:M]
    pos = out[:, :Nl].reshape(N, Ho, Wo, Cout)
    neg = out[:, Nl:].reshape(N, Ho, Wo, Cout)
    out_nhwc = jnp.concatenate([pos, neg], axis=-1)    # (N, Ho, Wo, 2*Cout)
    return jnp.transpose(out_nhwc, (0, 3, 1, 2))       # (N, 2*Cout, Ho, Wo)


def _reference(x_nchw, weight, gamma, beta, running_mean, running_var,
               *, stride=1, eps=1e-5):
    y = jax.lax.conv_general_dilated(
        x_nchw.astype(jnp.float32), weight.astype(jnp.float32),
        window_strides=(stride, stride), padding=((1, 1), (1, 1)),
        dimension_numbers=("NCHW", "OIHW", "NCHW"))
    scale = gamma / jnp.sqrt(running_var + eps)
    bias = beta - running_mean * scale
    y = y * scale[None, :, None, None] + bias[None, :, None, None]
    return jnp.concatenate([jnp.maximum(y, 0.0), jnp.maximum(-y, 0.0)], axis=1)


if __name__ == "__main__":
    # _conv_bn_crelu(inp=4, oup=8, stride, kernel=3) on a (2, 4, 16, 16) input.
    N, Cin, H, W = 2, 4, 16, 16
    Cout = 8

    key = jax.random.PRNGKey(0)
    kx, kw, kg, kb, km, kv = jax.random.split(key, 6)

    x = jax.random.normal(kx, (N, Cin, H, W), jnp.float32)
    weight = jax.random.normal(kw, (Cout, Cin, 3, 3), jnp.float32) * 0.1
    gamma = jax.random.uniform(kg, (Cout,), jnp.float32, 0.5, 1.5)
    beta = jax.random.normal(kb, (Cout,), jnp.float32) * 0.1
    running_mean = jax.random.normal(km, (Cout,), jnp.float32) * 0.1
    running_var = jax.random.uniform(kv, (Cout,), jnp.float32, 0.5, 1.5)

    for stride in (1, 2):
        # One-time weight prep (BN fold + banded [W,-W] build) — hoisted out of
        # the per-call forward path.
        w2, bias2 = fold_conv_bn_crelu_params(
            weight, gamma, beta, running_mean, running_var,
            H=H, W=W, stride=stride, kernel_size=3)
        out = conv_bn_crelu(x, w2, bias2, stride=stride, kernel_size=3)
        out = jax.block_until_ready(out)
        ref = _reference(x, weight, gamma, beta, running_mean, running_var,
                         stride=stride)
        Ho = (H + 2 - 3) // stride + 1
        assert out.shape == (N, 2 * Cout, Ho, Ho), out.shape
        # bf16 MXU operands -> relaxed tolerance vs the f32 reference.
        assert jnp.allclose(out, ref, atol=3e-2, rtol=3e-2), \
            f"mismatch vs reference (stride={stride})"
    print("KERNEL_OK")
</pallas_src>

<mosaic_0001>
module attributes {stable_mosaic.version = 11 : i64} {
  func.func @_conv_bn_crelu_kernel(%arg0: i32, %arg1: memref<16x216xbf16, #tpu.memory_space<vmem>>, %arg2: memref<216x256xbf16, #tpu.memory_space<vmem>>, %arg3: memref<1x256xf32, #tpu.memory_space<vmem>>, %arg4: memref<16x256xf32, #tpu.memory_space<vmem>>) attributes {dimension_semantics = [#tpu.dimension_semantics<parallel>], iteration_bounds = array<i64: 2>, scalar_prefetch = 0 : i64, scratch_operands = 0 : i64, tpu.core_type = #tpu.core_type<tc>, window_params = [{transform_indices = @transform_0, window_bounds = array<i64: 16, 216>}, {pipeline_mode = #tpu.pipeline_mode<synchronous>, transform_indices = @transform_1, window_bounds = array<i64: 216, 256>}, {pipeline_mode = #tpu.pipeline_mode<synchronous>, transform_indices = @transform_2, window_bounds = array<i64: 1, 256>}, {transform_indices = @transform_3, window_bounds = array<i64: 16, 256>}]} {
    %c0 = arith.constant 0 : index
    %c0_0 = arith.constant 0 : index
    %0 = vector.load %arg1[%c0, %c0_0] : memref<16x216xbf16, #tpu.memory_space<vmem>>, vector<16x216xbf16>
    %c0_1 = arith.constant 0 : index
    %c0_2 = arith.constant 0 : index
    %1 = vector.load %arg2[%c0_1, %c0_2] : memref<216x256xbf16, #tpu.memory_space<vmem>>, vector<216x256xbf16>
    %cst = arith.constant dense<0.000000e+00> : vector<16x256xf32>
    %2 = tpu.matmul %0, %1, %cst {dimension_numbers = #tpu.dot_dimension_numbers<[1], [0], [0], [1], [0, 0, 1, 1], [], []>} : vector<16x216xbf16>, vector<216x256xbf16>, vector<16x256xf32> -> vector<16x256xf32>
    %c0_3 = arith.constant 0 : index
    %c0_4 = arith.constant 0 : index
    %3 = vector.load %arg3[%c0_3, %c0_4] : memref<1x256xf32, #tpu.memory_space<vmem>>, vector<1x256xf32>
    %4 = vector.broadcast %3 : vector<1x256xf32> to vector<16x256xf32>
    %5 = arith.addf %2, %4 : vector<16x256xf32>
    %cst_5 = arith.constant 0.000000e+00 : f32
    %6 = vector.broadcast %cst_5 : f32 to vector<16x256xf32>
    %7 = arith.maximumf %5, %6 : vector<16x256xf32>
    %c0_6 = arith.constant 0 : index
    %c0_7 = arith.constant 0 : index
    %8 = vector.load %arg4[%c0_6, %c0_7] : memref<16x256xf32, #tpu.memory_space<vmem>>, vector<16x256xf32>
    tpu.vector_store %arg4[%c0_6, %c0_7], %7 {strides = array<i32>} : memref<16x256xf32, #tpu.memory_space<vmem>>, vector<16x256xf32>,
    return
  }
  func.func @transform_0(%arg0: i32) -> (i32, i32) {
    %c0_i32 = arith.constant 0 : i32
    %c0_i32_0 = arith.constant 0 : i32
    return %arg0, %c0_i32 : i32, i32
  }
  func.func @transform_1(%arg0: i32) -> (i32, i32) {
    %c0_i32 = arith.constant 0 : i32
    %c0_i32_0 = arith.constant 0 : i32
    %c0_i32_1 = arith.constant 0 : i32
    return %c0_i32, %c0_i32_0 : i32, i32
  }
  func.func @transform_2(%arg0: i32) -> (i32, i32) {
    %c0_i32 = arith.constant 0 : i32
    %c0_i32_0 = arith.constant 0 : i32
    %c0_i32_1 = arith.constant 0 : i32
    return %c0_i32, %c0_i32_0 : i32, i32
  }
  func.func @transform_3(%arg0: i32) -> (i32, i32) {
    %c0_i32 = arith.constant 0 : i32
    %c0_i32_0 = arith.constant 0 : i32
    return %arg0, %c0_i32 : i32, i32
  }
}

</mosaic_0001>

<llo_original>
// kernel: conv_bn_crelu.1
$region0: #{conv_bn_crelu.1}
  #allocation0 [shape = 'u32[]', space=smem, size = 0x4, offset = 0x4, fixed_abs, tag = 'smem constant byte address 0x4 - core index']
  #allocation1 [shape = 'u32[144,128]{1,0:T(1,128)}', space=vmem, size = 0x12000, scoped, tag = 'internal scratch']
  %s0 = inlined_call_operand.vmem [shape: bf16[32,216], index: 0, kind: input, shape index: {}]
  %s1 = inlined_call_operand.vmem [shape: bf16[216,256], index: 1, kind: input, shape index: {}]
  %s2 = inlined_call_operand.vmem [shape: f32[1,256], index: 2, kind: input, shape index: {}]
  %s3 = inlined_call_operand.vmem [shape: f32[32,256], index: 3, kind: output, shape index: {}]
  %s4 = sld [smem:[#allocation0]]
  $region45: #{conv_bn_crelu.1} parent=0
    _
  %s6 = ssub.s32 1, %s4
  %s7 = scalar_select 0, %s6, %s4
  loop: start=0, step=1, limit=4
  $region2: #{conv_bn_crelu.1} parent=0 // loop_pre_header
    _
  $region3: #{conv_bn_crelu.1} parent=0 // loop_header
    %s9 = sphi 0, %s13
    %p10 = scmp.ge.s32.totalorder %s9, 4
    %s19 = sphi 0, %s21
    %s22 = sphi 0, %s19
    %s23 = sphi 0, %s22
    %s39 = sphi 0, %s23
    %s43 = sphi 0, %s43
    %s45 = sphi 0, %s43
    %s46 = sphi 0, %s45
    %s60 = sphi 0, %s46
    %s64 = sphi 0, %s64
    %s66 = sphi 0, %s64
    %s67 = sphi 0, %s66
    %s81 = sphi 0, %s67
    %s87 = sphi 0, %s89
    %s90 = sphi 0, %s87
    %s91 = sphi 0, %s90
    %s107 = sphi 0, %s91
  $region4: #{conv_bn_crelu.1} parent=0 // loop_header_branch
    %12 = sbr.rel (%p10) target = $region8
  $region5: #{conv_bn_crelu.1} parent=0 // loop_body
    %s14 = ssub.s32 %s9, 1
    %s15 = ssub.s32 %s9, 2
    %s16 = sadd.s32 %s9, 1
    %s17 = ssub.s32 %s9, %s16
    %p18 = scmp.eq.s32.totalorder %s17, 0
    %s20 = sadd.s32 %s19, 1
    %s21 = scalar_select %p18, %s19, %s20
    %p24 = pneg %p18
    %p25 = scmp.eq.s32.totalorder %s9, 1
    %p26 = por %p24, %p25
    %p27 = scmp.ne.s32.totalorder %s19, %s22
    %p28 = scmp.eq.s32.totalorder %s9, 0
    %p29 = por %p27, %p28
    %p30 = scmp.ne.s32.totalorder %s19, %s22
    %p31 = scmp.eq.s32.totalorder %s14, 1
    %p32 = por %p30, %p31
    %p33 = scmp.ne.s32.totalorder %s22, %s23
    %p34 = scmp.eq.s32.totalorder %s14, 0
    %p35 = por %p33, %p34
    %p36 = scmp.ne.s32.totalorder %s22, %s23
    %p37 = scmp.eq.s32.totalorder %s15, 1
    %p38 = por %p36, %p37
    %p40 = scmp.ne.s32.totalorder %s23, %s39
    %p41 = scmp.eq.s32.totalorder %s15, 0
    %p42 = por %p40, %p41
    %s44 = sadd.s32 %s43, 1
    %p47 = scmp.eq.s32.totalorder %s9, 1
    %p48 = scmp.ne.s32.totalorder %s43, %s45
    %p49 = scmp.eq.s32.totalorder %s9, 0
    %p50 = por %p48, %p49
    %p51 = scmp.ne.s32.totalorder %s43, %s45
    %p52 = scmp.eq.s32.totalorder %s14, 1
    %p53 = por %p51, %p52
    %p54 = scmp.ne.s32.totalorder %s45, %s46
    %p55 = scmp.eq.s32.totalorder %s14, 0
    %p56 = por %p54, %p55
    %p57 = scmp.ne.s32.totalorder %s45, %s46
    %p58 = scmp.eq.s32.totalorder %s15, 1
    %p59 = por %p57, %p58
    %p61 = scmp.ne.s32.totalorder %s46, %s60
    %p62 = scmp.eq.s32.totalorder %s15, 0
    %p63 = por %p61, %p62
    %s65 = sadd.s32 %s64, 1
    %p68 = scmp.eq.s32.totalorder %s9, 1
    %p69 = scmp.ne.s32.totalorder %s64, %s66
    %p70 = scmp.eq.s32.totalorder %s9, 0
    %p71 = por %p69, %p70
    %p72 = scmp.ne.s32.totalorder %s64, %s66
    %p73 = scmp.eq.s32.totalorder %s14, 1
    %p74 = por %p72, %p73
    %p75 = scmp.ne.s32.totalorder %s66, %s67
    %p76 = scmp.eq.s32.totalorder %s14, 0
    %p77 = por %p75, %p76
    %p78 = scmp.ne.s32.totalorder %s66, %s67
    %p79 = scmp.eq.s32.totalorder %s15, 1
    %p80 = por %p78, %p79
    %p82 = scmp.ne.s32.totalorder %s67, %s81
    %p83 = scmp.eq.s32.totalorder %s15, 0
    %p84 = por %p82, %p83
    %s85 = ssub.s32 %s9, %s16
    %p86 = scmp.eq.s32.totalorder %s85, 0
    %s88 = sadd.s32 %s87, 1
    %s89 = scalar_select %p86, %s87, %s88
    %p92 = pneg %p86
    %p93 = scmp.eq.s32.totalorder %s9, 1
    %p94 = por %p92, %p93
    %p95 = scmp.ne.s32.totalorder %s87, %s90
    %p96 = scmp.eq.s32.totalorder %s9, 0
    %p97 = por %p95, %p96
    %p98 = scmp.ne.s32.totalorder %s87, %s90
    %p99 = scmp.eq.s32.totalorder %s14, 1
    %p100 = por %p98, %p99
    %p101 = scmp.ne.s32.totalorder %s90, %s91
    %p102 = scmp.eq.s32.totalorder %s14, 0
    %p103 = por %p101, %p102
    %p104 = scmp.ne.s32.totalorder %s90, %s91
    %p105 = scmp.eq.s32.totalorder %s15, 1
    %p106 = por %p104, %p105
    %p108 = scmp.ne.s32.totalorder %s91, %s107
    %p109 = scmp.eq.s32.totalorder %s15, 0
    %p110 = por %p108, %p109
    %p111 = scmp.le.s32.totalorder 1, %s9
    %p112 = scmp.lt.s32.totalorder %s9, 3
    %p113 = pnand %p111, %p112
    %p114 = pneg %p113
    // Predicated region
    $region9: #{conv_bn_crelu.1} parent=5 // pred_check
      _
    $region10: #{conv_bn_crelu.1} parent=5 // pred_check_branch
      %116 = sbr.rel (%p113) target = $region12
    $region11: #{conv_bn_crelu.1} parent=5 // pred_region
      %s117 = ssub.s32 %s9, 1
      // Predicated region
      $region13: #{conv_bn_crelu.1} parent=11 // pred_check
        %p118 = pneg %p56
      $region14: #{conv_bn_crelu.1} parent=11 // pred_check_branch
        %120 = sbr.rel (%p118) target = $region16
      $region15: #{conv_bn_crelu.1} parent=11 // pred_region
        _
      $region16: #{conv_bn_crelu.1} parent=11 // pred_fallthru
        _
      // Predicated region
      $region17: #{conv_bn_crelu.1} parent=11 // pred_check
        %p121 = pneg %p77
      $region18: #{conv_bn_crelu.1} parent=11 // pred_check_branch
        %123 = sbr.rel (%p121) target = $region20
      $region19: #{conv_bn_crelu.1} parent=11 // pred_region
        _
      $region20: #{conv_bn_crelu.1} parent=11 // pred_fallthru
        _
    $region12: #{conv_bn_crelu.1} parent=5 // pred_fallthru
      _
    %p124 = scmp.lt.s32.totalorder %s9, 2
    // Predicated region
    $region21: #{conv_bn_crelu.1} parent=5 // pred_check
      %p125 = pneg %p124
    $region22: #{conv_bn_crelu.1} parent=5 // pred_check_branch
      %127 = sbr.rel (%p125) target = $region24
    $region23: #{conv_bn_crelu.1} parent=5 // pred_region
      // Predicated region
      $region25: #{conv_bn_crelu.1} parent=23 // pred_check
        %p128 = pneg %p29
      $region26: #{conv_bn_crelu.1} parent=23 // pred_check_branch
        %130 = sbr.rel (%p128) target = $region28
      $region27: #{conv_bn_crelu.1} parent=23 // pred_region
        %s131 = smul.u32 2, %s9
        %p132 = scmp.lt.s32.totalorder %s131, 3
        %s133 = scalar_select %p132, %s131, 3
        %s134 = smul.addr %s133, 2
        %s135 = smul.addr %s134, 4
        %s136 = scalar_lea.vmem %s0, %s135
        %s137 = smul.u32 2, %s9
      $region28: #{conv_bn_crelu.1} parent=23 // pred_fallthru
        _
    $region24: #{conv_bn_crelu.1} parent=5 // pred_fallthru
      _
    %p138 = scmp.le.s32.totalorder 1, %s9
    %p139 = scmp.lt.s32.totalorder %s9, 3
    %p140 = pnand %p138, %p139
    %p141 = pneg %p140
    // Predicated region
    $region29: #{conv_bn_crelu.1} parent=5 // pred_check
      _
    $region30: #{conv_bn_crelu.1} parent=5 // pred_check_branch
      %143 = sbr.rel (%p140) target = $region32
    $region31: #{conv_bn_crelu.1} parent=5 // pred_region
      %s144 = ssub.s32 %s9, 1
      %s145 = smul.u32 2, %s14
      %p146 = scmp.lt.s32.totalorder %s145, 3
      %s147 = scalar_select %p146, %s145, 3
      %s148 = smul.addr %s147, 2
      %s149 = smul.addr %s148, 4
      %s150 = scalar_lea.vmem %s0, %s149
      %p151 = pneg %p35
      %p152 = pneg %p32
      %p153 = pneg %p56
      %p154 = pneg %p53
      %p155 = pneg %p77
      %p156 = pneg %p74
      %p157 = pneg %p103
      %p158 = pneg %p100
      %s159 = smul.u32 2, %s14
      %p160 = scmp.lt.s32.totalorder %s159, 3
      %s161 = scalar_select %p160, %s159, 3
      %s162 = smul.addr %s161, 2
      %s163 = smul.addr %s162, 8
      %s164 = scalar_lea.vmem %s3, %s163
      %s165 = smul.u32 2, %s14
      %p166 = scmp.lt.s32.totalorder %s165, 3
      %s167 = scalar_select %p166, %s165, 3
      %s168 = smul.addr %s167, 2
      %s169 = smul.addr %s168, 4
      %s170 = scalar_lea.vmem %s0, %s169
      %s171 = smul.u32 2, %s14
      %s172 = smul.u32 2, %s14
      %p173 = scmp.lt.s32.totalorder %s172, 3
      %s174 = scalar_select %p173, %s172, 3
      %s175 = smul.addr %s174, 2
      %s176 = smul.addr %s175, 8
      %s177 = scalar_lea.vmem %s3, %s176
      %s178 = smul.u32 2, %s14
      %v180 = vld [vmem:[%s170] sm:$0xff]
      %v181 = vld [vmem:[%s170 + $0x8] sm:$0xff]
      %v182 = vld [vmem:[%s1] sm:$0xff]
      %v183 = vld [vmem:[%s1 + $0x8] sm:$0xff]
      %v184 = vld [vmem:[%s1 + $0x10] sm:$0xff]
      %v185 = vld [vmem:[%s1 + $0x18] sm:$0xff]
      %v186 = vld [vmem:[%s1 + $0x20] sm:$0xff]
      %v187 = vld [vmem:[%s1 + $0x28] sm:$0xff]
      %v188 = vld [vmem:[%s1 + $0x30] sm:$0xff]
      %v189 = vld [vmem:[%s1 + $0x38] sm:$0xff]
      %v190 = vld [vmem:[%s1 + $0x40] sm:$0xff]
      %v191 = vld [vmem:[%s1 + $0x48] sm:$0xff]
      %v192 = vld [vmem:[%s1 + $0x50] sm:$0xff]
      %v193 = vld [vmem:[%s1 + $0x58] sm:$0xff]
      %v194 = vld [vmem:[%s1 + $0x60] sm:$0xff]
      %v195 = vld [vmem:[%s1 + $0x68] sm:$0xff]
      %v196 = vld [vmem:[%s1 + $0x70] sm:$0xff]
      %v197 = vld [vmem:[%s1 + $0x78] sm:$0xff]
      %v198 = vld [vmem:[%s1 + $0x80] sm:$0xff]
      %v199 = vld [vmem:[%s1 + $0x88] sm:$0xff]
      %v200 = vld [vmem:[%s1 + $0x90] sm:$0xff]
      %v201 = vld [vmem:[%s1 + $0x98] sm:$0xff]
      %v202 = vld [vmem:[%s1 + $0xa0] sm:$0xff]
      %v203 = vld [vmem:[%s1 + $0xa8] sm:$0xff]
      %v204 = vld [vmem:[%s1 + $0xb0] sm:$0xff]
      %v205 = vld [vmem:[%s1 + $0xb8] sm:$0xff]
      %v206 = vld [vmem:[%s1 + $0xc0] sm:$0xff]
      %v207 = vld [vmem:[%s1 + $0xc8] sm:$0xff]
      %v208 = vld [vmem:[%s1 + $0xd0] sm:$0xff]
      %v209 = vld [vmem:[%s2] sm:$0x3]
      %v211 = vlaneseq
      %v212 = vshrl.u32 %v211, 7
      %v213 = vsub.s32 0, %v212
      %v214 = vrot.slane %v209, %v213
      %v215 = vlaneseq
      %v216 = vshrl.u32 %v215, 7
      %v217 = vsub.s32 1, %v216
      %v218 = vrot.slane %v209, %v217
      %v223 = vunpack.c.l.b16 %v180
      %v224 = vunpack.c.h.b16 %v180
      %v225 = vunpack.c.l.b16 %v181
      %v226 = vunpack.c.h.b16 %v181
      %v227 = vpack.c.b16 %v225, %v223
      %v228 = vpack.c.b16 %v226, %v224
      %v257 = vunpack.c.l.b16 %v182
      %v258 = vunpack.c.h.b16 %v182
      %v259 = vunpack.c.l.b16 %v183
      %v260 = vunpack.c.h.b16 %v183
      %v261 = vunpack.c.l.b16 %v184
      %v262 = vunpack.c.h.b16 %v184
      %v263 = vunpack.c.l.b16 %v185
      %v264 = vunpack.c.h.b16 %v185
      %v265 = vunpack.c.l.b16 %v186
      %v266 = vunpack.c.h.b16 %v186
      %v267 = vunpack.c.l.b16 %v187
      %v268 = vunpack.c.h.b16 %v187
      %v269 = vunpack.c.l.b16 %v188
      %v270 = vunpack.c.h.b16 %v188
      %v271 = vunpack.c.l.b16 %v189
      %v272 = vunpack.c.h.b16 %v189
      %v273 = vunpack.c.l.b16 %v190
      %v274 = vunpack.c.h.b16 %v190
      %v275 = vunpack.c.l.b16 %v191
      %v276 = vunpack.c.h.b16 %v191
      %v277 = vunpack.c.l.b16 %v192
      %v278 = vunpack.c.h.b16 %v192
      %v279 = vunpack.c.l.b16 %v193
      %v280 = vunpack.c.h.b16 %v193
      %v281 = vunpack.c.l.b16 %v194
      %v282 = vunpack.c.h.b16 %v194
      %v283 = vunpack.c.l.b16 %v195
      %v284 = vunpack.c.h.b16 %v195
      %v285 = vunpack.c.l.b16 %v196
      %v286 = vunpack.c.h.b16 %v196
      %v287 = vunpack.c.l.b16 %v197
      %v288 = vunpack.c.h.b16 %v197
      %v289 = vunpack.c.l.b16 %v198
      %v290 = vunpack.c.h.b16 %v198
      %v291 = vunpack.c.l.b16 %v199
      %v292 = vunpack.c.h.b16 %v199
      %v293 = vunpack.c.l.b16 %v200
      %v294 = vunpack.c.h.b16 %v200
      %v295 = vunpack.c.l.b16 %v201
      %v296 = vunpack.c.h.b16 %v201
      %v297 = vunpack.c.l.b16 %v202
      %v298 = vunpack.c.h.b16 %v202
      %v299 = vunpack.c.l.b16 %v203
      %v300 = vunpack.c.h.b16 %v203
      %v301 = vunpack.c.l.b16 %v204
      %v302 = vunpack.c.h.b16 %v204
      %v303 = vunpack.c.l.b16 %v205
      %v304 = vunpack.c.h.b16 %v205
      %v305 = vunpack.c.l.b16 %v206
      %v306 = vunpack.c.h.b16 %v206
      %v307 = vunpack.c.l.b16 %v207
      %v308 = vunpack.c.h.b16 %v207
      %v309 = vunpack.c.l.b16 %v208
      %v310 = vunpack.c.h.b16 %v208
      %v311 = vpack.c.b16 %v259, %v257
      %v312 = vpack.c.b16 %v260, %v258
      %v313 = vpack.c.b16 %v263, %v261
      %v314 = vpack.c.b16 %v264, %v262
      %v315 = vpack.c.b16 %v267, %v265
      %v316 = vpack.c.b16 %v268, %v266
      %v317 = vpack.c.b16 %v271, %v269
      %v318 = vpack.c.b16 %v272, %v270
      %v319 = vpack.c.b16 %v275, %v273
      %v320 = vpack.c.b16 %v276, %v274
      %v321 = vpack.c.b16 %v279, %v277
      %v322 = vpack.c.b16 %v280, %v278
      %v323 = vpack.c.b16 %v283, %v281
      %v324 = vpack.c.b16 %v284, %v282
      %v325 = vpack.c.b16 %v287, %v285
      %v326 = vpack.c.b16 %v288, %v286
      %v327 = vpack.c.b16 %v291, %v289
      %v328 = vpack.c.b16 %v292, %v290
      %v329 = vpack.c.b16 %v295, %v293
      %v330 = vpack.c.b16 %v296, %v294
      %v331 = vpack.c.b16 %v299, %v297
      %v332 = vpack.c.b16 %v300, %v298
      %v333 = vpack.c.b16 %v303, %v301
      %v334 = vpack.c.b16 %v304, %v302
      %v335 = vpack.c.b16 %v307, %v305
      %v336 = vpack.c.b16 %v308, %v306
      %v337 = vpack.c.b16 %v309, %v309
      %v338 = vpack.c.b16 %v310, %v310
      %vm365 = vcmask 719872
      %v367 = vsel %vm365, %v228, 0
      %vm369 = vcmask 1043456
      %v371 = vsel %vm369, %v337, 0
      %v374 = vsel %vm369, %v338, 0
      %376 = vmatprep.subr.bf16.mxu0 %v312
      %377 = vmatpush1.bf16.msra.mxu0 %v311
      %378 = vmatprep.subr.bf16.mxu0 %v314
      %379 = vmatpush1.bf16.msra.mxu0 %v313
      %380 = vmatprep.subr.bf16.mxu0 %v316
      %381 = vmatpush1.bf16.msra.mxu0 %v315
      %382 = vmatprep.subr.bf16.mxu0 %v318
      %383 = vmatpush1.bf16.msra.mxu0 %v317
      %384 = vmatprep.subr.bf16.mxu0 %v320
      %385 = vmatpush1.bf16.msra.mxu0 %v319
      %386 = vmatprep.subr.bf16.mxu0 %v322
      %387 = vmatpush1.bf16.msra.mxu0 %v321
      %388 = vmatprep.subr.bf16.mxu0 %v324
      %389 = vmatpush1.bf16.msra.mxu0 %v323
      %390 = vmatprep.subr.bf16.mxu0 %v326
      %391 = vmatpush1.bf16.msra.mxu0 %v325
      %392 = vmatprep.subr.bf16.mxu0 %v328
      %393 = vmatpush1.bf16.msra.mxu0 %v327
      %394 = vmatprep.subr.bf16.mxu0 %v330
      %395 = vmatpush1.bf16.msra.mxu0 %v329
      %396 = vmatprep.subr.bf16.mxu0 %v332
      %397 = vmatpush1.bf16.msra.mxu0 %v331
      %398 = vmatprep.subr.bf16.mxu0 %v334
      %399 = vmatpush1.bf16.msra.mxu0 %v333
      %400 = vmatprep.subr.bf16.mxu0 %v336
      %401 = vmatpush1.bf16.msra.mxu0 %v335
      %402 = vmatprep.subr.bf16.mxu0 %v374
      %403 = vmatpush1.bf16.msra.mxu0 %v371
      %404 = vmatprep.subr.bf16.mxu0 0
      %405 = vmatpush1.bf16.msra.mxu0 0
      %406 = vmatprep.subr.bf16.mxu0 0
      %407 = vmatpush1.bf16.msra.mxu0 0
      %408 = vmatprep.mubr.bf16.mxu0 %v367
      %409 = vmatmul.mubr.bf16.gmra.mrb[0].mxu0 %v227
      %v410 = vpop.f32.mrb[0].mxu0
      %v411 = vadd.f32 %v214, %v410
      %v412 = vpop.f32.mrb[0].mxu0
      %v413 = vadd.f32 %v218, %v412
      %v414 = vpop.f32.mrb[0].mxu0
      %v415 = vadd.f32 %v214, %v414
      %v416 = vpop.f32.mrb[0].mxu0
      %v417 = vadd.f32 %v218, %v416
      %418 = vdwg.mxu0
      %v419 = vmax.f32 %v411, 0.0
      %v420 = vmax.f32 %v413, 0.0
      %v421 = vmax.f32 %v415, 0.0
      %v422 = vmax.f32 %v417, 0.0
      %423 = vst [vmem:[%s177] sm:$0xff] %v419
      %424 = vst [vmem:[%s177 + $0x8] sm:$0xff] %v420
      %425 = vst [vmem:[%s177 + $0x10] sm:$0xff] %v421
      %426 = vst [vmem:[%s177 + $0x18] sm:$0xff] %v422
      %s427 = smul.u32 2, %s14
      %p428 = scmp.lt.s32.totalorder %s427, 3
      %s429 = scalar_select %p428, %s427, 3
      %s430 = smul.addr %s429, 2
      %s431 = smul.addr %s430, 8
      %s432 = scalar_lea.vmem %s3, %s431
      // Predicated region
      $region33: #{conv_bn_crelu.1} parent=31 // pred_check
        %p433 = pneg %p100
      $region34: #{conv_bn_crelu.1} parent=31 // pred_check_branch
        %435 = sbr.rel (%p433) target = $region36
      $region35: #{conv_bn_crelu.1} parent=31 // pred_region
        %s436 = smul.u32 2, %s14
      $region36: #{conv_bn_crelu.1} parent=31 // pred_fallthru
        _
    $region32: #{conv_bn_crelu.1} parent=5 // pred_fallthru
      _
    %p437 = scmp.le.s32.totalorder 2, %s9
    // Predicated region
    $region37: #{conv_bn_crelu.1} parent=5 // pred_check
      %p438 = pneg %p437
    $region38: #{conv_bn_crelu.1} parent=5 // pred_check_branch
      %440 = sbr.rel (%p438) target = $region40
    $region39: #{conv_bn_crelu.1} parent=5 // pred_region
      %s441 = ssub.s32 %s9, 2
      // Predicated region
      $region41: #{conv_bn_crelu.1} parent=39 // pred_check
        %p442 = pneg %p106
      $region42: #{conv_bn_crelu.1} parent=39 // pred_check_branch
        %444 = sbr.rel (%p442) target = $region44
      $region43: #{conv_bn_crelu.1} parent=39 // pred_region
        %s445 = smul.u32 2, %s15
        %p446 = scmp.lt.s32.totalorder %s445, 3
        %s447 = scalar_select %p446, %s445, 3
        %s448 = smul.addr %s447, 2
        %s449 = smul.addr %s448, 8
        %s450 = scalar_lea.vmem %s3, %s449
      $region44: #{conv_bn_crelu.1} parent=39 // pred_fallthru
        _
    $region40: #{conv_bn_crelu.1} parent=5 // pred_fallthru
      _
  $region6: #{conv_bn_crelu.1} parent=0 // loop_footer
    %s13 = sadd.s32 1, %s9
  $region7: #{conv_bn_crelu.1} parent=0 // loop_footer_branch
    %8 = sbr.rel target = $region3
  $region8: #{conv_bn_crelu.1} parent=0 // loop_exit
    _

</llo_original>
